<compile_context>
chip_gen: v6e
topology: v6e:2x2x1
jax: 0.10.0
libtpu: 0.0.40
codegen_flags: <defaults>
</compile_context>

<pallas_src>
import math
import jax
import jax.numpy as jnp
from jax.experimental import pallas as pl
from jax.experimental.pallas import tpu as pltpu

OUT_FEATURES = 512


# --------------------------------------------------------------------------- #
# Kernels
# --------------------------------------------------------------------------- #
def _glu_kernel_resident(x_ref, wv_ref, b_ref, o_ref):
    # x_ref : (tm, Kp)   bf16 row tile of the activations
    # wv_ref: (Kp, 2N)   bf16 fused [W | V] slab (VMEM-resident across M loop)
    # b_ref : (1, 2N)    f32 fused [b_W | b_V]
    # o_ref : (tm, N)    lane-dense output tile (N = 512)
    h = jnp.dot(x_ref[...], wv_ref[...],
                preferred_element_type=jnp.float32) + b_ref[...]
    wx = h[:, :OUT_FEATURES]
    vx = h[:, OUT_FEATURES:]
    gate = pl.reciprocal(1.0 + jnp.exp(-vx), approx=True)   # EUP exp + recip
    o_ref[...] = (wx * gate).astype(o_ref.dtype)


def _glu_kernel_ktiled(x_ref, wv_ref, b_ref, o_ref, acc_ref):
    # K-tiled variant: f32 accumulator resident across the k axis.
    k = pl.program_id(1)

    @pl.when(k == 0)
    def _():
        acc_ref[...] = jnp.zeros_like(acc_ref)

    acc_ref[...] += jnp.dot(x_ref[...], wv_ref[...],
                            preferred_element_type=jnp.float32)

    @pl.when(k == pl.num_programs(1) - 1)
    def _():
        h = acc_ref[...] + b_ref[...]
        wx = h[:, :OUT_FEATURES]
        vx = h[:, OUT_FEATURES:]
        gate = pl.reciprocal(1.0 + jnp.exp(-vx), approx=True)
        o_ref[...] = (wx * gate).astype(o_ref.dtype)


# --------------------------------------------------------------------------- #
# Tiling / VMEM planning
# --------------------------------------------------------------------------- #
def _round_up(n, m):
    return ((n + m - 1) // m) * m


def _vmem_budget_bytes():
    """75% of the chip's VMEM: ~96 MiB on v5e/v6e (128 MiB), ~48 MiB on v7x."""
    cap = 64 << 20  # conservative default (v7x-sized)
    try:
        info = pltpu.get_tpu_info()
        cap = int(getattr(info, "vmem_capacity_bytes", cap) or cap)
    except Exception:
        pass
    return (cap * 3) // 4


def _maybe_single_buffered(block_shape, index_map):
    """Constant-index (resident) operands: request a single VMEM buffer.

    Saves a full extra copy of the weight slab in VMEM (matters on v7x's
    64 MiB). Falls back to the default double-buffered spec if this JAX
    version does not expose BlockSpec(pipeline_mode=pl.Buffered(...)).
    """
    buffered = getattr(pl, "Buffered", None)
    if buffered is not None:
        try:
            return pl.BlockSpec(block_shape, index_map,
                                pipeline_mode=buffered(buffer_count=1))
        except Exception:
            pass
    return pl.BlockSpec(block_shape, index_map)


def _choose_plan(M, K_pad, N2, out_bytes, budget):
    """Return ("resident", tm, None) or ("ktiled", tm, tk) fitting `budget`."""
    N = N2 // 2
    BF16 = 2

    def resident_fits(tm):
        w = K_pad * N2 * BF16 + N2 * 4            # weights + bias (1 buffer)
        xb = 2 * tm * K_pad * BF16                # x tiles, double-buffered
        ob = 2 * tm * N * out_bytes               # out tiles, double-buffered
        tmp = tm * N2 * 4                         # f32 h intermediate headroom
        return w + xb + ob + tmp <= budget

    for tm in (2048, 1024, 512, 256, 128):
        tm_eff = min(tm, M)
        if resident_fits(tm_eff):
            return ("resident", tm_eff, None)

    # Resident weights would blow VMEM (very large K): tile the K axis.
    for tk in (2048, 1024, 512, 256):
        for tm in (512, 256, 128):
            tm_eff = min(tm, M)
            w = 2 * tk * N2 * BF16 + N2 * 4       # weight K-slabs, double-buf
            xb = 2 * tm_eff * tk * BF16
            acc = tm_eff * N2 * 4                 # f32 accumulator scratch
            ob = 2 * tm_eff * N * out_bytes
            tmp = tm_eff * N2 * 4
            if w + xb + acc + ob + tmp <= budget:
                return ("ktiled", tm_eff, tk)
    return ("ktiled", min(128, M), 256)           # last-resort fallback


# --------------------------------------------------------------------------- #
# Wrapper
# --------------------------------------------------------------------------- #
def glu_forward(x, wv, b_wv, *, out_dtype=None, tm=None, k_tile=None):
    """x: [M, K]; wv: [K, 2N] fused weights; b_wv: [2N]. Returns [M, N]."""
    M, K = x.shape
    N2 = wv.shape[1]
    N = N2 // 2
    assert N == OUT_FEATURES and wv.shape[0] == K and b_wv.shape == (N2,)

    out_dtype = out_dtype or x.dtype
    out_bytes = jnp.dtype(out_dtype).itemsize
    budget = _vmem_budget_bytes()

    # ---- pick an execution plan (or honor explicit overrides) -------------
    K_pad = _round_up(max(K, 128), 128)           # lane-dense K
    if k_tile is not None:
        plan, tm_sel, tk_sel = "ktiled", min(tm or 256, M), k_tile
    elif tm is not None:
        plan, tm_sel, tk_sel = "resident", min(tm, M), None
    else:
        plan, tm_sel, tk_sel = _choose_plan(M, K_pad, N2, out_bytes, budget)
    if plan == "ktiled":
        K_pad = _round_up(max(K, tk_sel), tk_sel)  # partial K blocks -> pad

    # ---- operand prep: bf16 MXU inputs, zero-pad K (numerically free) -----
    xb = x.astype(jnp.bfloat16)
    wvb = wv.astype(jnp.bfloat16)
    if K_pad != K:
        xb = jnp.pad(xb, ((0, 0), (0, K_pad - K)))
        wvb = jnp.pad(wvb, ((0, K_pad - K), (0, 0)))
    b2 = b_wv.reshape(1, N2).astype(jnp.float32)

    grid_m = pl.cdiv(M, tm_sel)
    cost = pl.CostEstimate(
        flops=2 * M * K_pad * N2,
        transcendentals=2 * M * N,                       # exp + reciprocal
        bytes_accessed=2 * (M * K_pad + K_pad * N2) + 4 * N2 + out_bytes * M * N,
    )

    if plan == "resident":
        grid = (grid_m,)
        in_specs = [
            pl.BlockSpec((tm_sel, K_pad), lambda i: (i, 0)),           # x tile
            _maybe_single_buffered((K_pad, N2), lambda i: (0, 0)),     # weights
            _maybe_single_buffered((1, N2), lambda i: (0, 0)),         # biases
        ]
        out_specs = pl.BlockSpec((tm_sel, N), lambda i: (i, 0))
        kernel = _glu_kernel_resident
        scratch = ()
        dims = ("parallel",)
    else:
        grid_k = K_pad // tk_sel
        grid = (grid_m, grid_k)
        in_specs = [
            pl.BlockSpec((tm_sel, tk_sel), lambda i, k: (i, k)),       # x tile
            pl.BlockSpec((tk_sel, N2), lambda i, k: (k, 0)),           # W slab
            _maybe_single_buffered((1, N2), lambda i, k: (0, 0)),      # biases
        ]
        out_specs = pl.BlockSpec((tm_sel, N), lambda i, k: (i, 0))
        kernel = _glu_kernel_ktiled
        scratch = (pltpu.VMEM((tm_sel, N2), jnp.float32),)
        dims = ("parallel", "arbitrary")

    return pl.pallas_call(
        kernel,
        out_shape=jax.ShapeDtypeStruct((M, N), out_dtype),
        grid_spec=pltpu.PrefetchScalarGridSpec(
            num_scalar_prefetch=0,
            grid=grid,
            in_specs=in_specs,
            out_specs=out_specs,
            scratch_shapes=scratch,
        ),
        compiler_params=pltpu.CompilerParams(
            dimension_semantics=dims,
            vmem_limit_bytes=budget,
        ),
        cost_estimate=cost,
    )(xb, wvb, b2)


# --------------------------------------------------------------------------- #
# Params / module-level API
# --------------------------------------------------------------------------- #
def xavier_uniform(key, fan_in, fan_out, dtype=jnp.float32):
    # matches nn.init.xavier_uniform_ for a Linear(fan_in -> fan_out)
    bound = math.sqrt(6.0 / (fan_in + fan_out))
    # stored as [fan_in, fan_out] (i.e. W^T relative to PyTorch's [out, in])
    return jax.random.uniform(key, (fan_in, fan_out), dtype,
                              minval=-bound, maxval=bound)


class GLUParams:
    def __init__(self, key, in_features, dropout_rate=0.1):
        kw, kv = jax.random.split(key)
        self.w = xavier_uniform(kw, in_features, OUT_FEATURES)
        self.b_w = jnp.zeros((OUT_FEATURES,), jnp.float32)
        self.v = xavier_uniform(kv, in_features, OUT_FEATURES)
        self.b_v = jnp.zeros((OUT_FEATURES,), jnp.float32)
        self.dropout_rate = dropout_rate  # identity in eval mode
        # Fused [W | V] slab and [b_W | b_V] biases (done once, outside kernel).
        self.wv = jnp.concatenate([self.w, self.v], axis=1)        # [K, 2N]
        self.b_wv = jnp.concatenate([self.b_w, self.b_v], axis=0)  # [2N]


def glu_apply(params, x, **kwargs):
    # x: [..., in_features] -> [..., 512]
    lead = x.shape[:-1]
    K = x.shape[-1]
    y = glu_forward(x.reshape(-1, K), params.wv, params.b_wv, **kwargs)
    return y.reshape(*lead, OUT_FEATURES)


def glu_reference(params, x):
    wx = x @ params.w + params.b_w
    vx = x @ params.v + params.b_v
    return wx * jax.nn.sigmoid(vx)


# --------------------------------------------------------------------------- #
if __name__ == "__main__":
    key = jax.random.PRNGKey(0)
    k_p1, k_x1, k_p2, k_x2 = jax.random.split(key, 4)

    # --- Test 1: module-sized shapes, resident-weights path (K=32 -> 128) ---
    batch, seq, in_features = 2, 8, 32
    params = GLUParams(k_p1, in_features, dropout_rate=0.1)
    x = jax.random.normal(k_x1, (batch, seq, in_features), jnp.float32)

    y = glu_apply(params, x)
    jax.block_until_ready(y)
    y_ref = glu_reference(params, x)
    assert y.shape == (batch, seq, OUT_FEATURES)
    # bf16 MXU inputs -> loosened tolerance vs the f32 reference.
    assert jnp.allclose(y, y_ref, atol=2e-2, rtol=2e-2)

    # --- Test 2: exercise the K-tiled accumulator path (forced) -------------
    in_features2 = 1024
    params2 = GLUParams(k_p2, in_features2, dropout_rate=0.1)
    x2 = jax.random.normal(k_x2, (4, 16, in_features2), jnp.float32)

    y2 = glu_apply(params2, x2, k_tile=256)
    jax.block_until_ready(y2)
    y2_ref = glu_reference(params2, x2)
    assert y2.shape == (4, 16, OUT_FEATURES)
    assert jnp.allclose(y2, y2_ref, atol=5e-2, rtol=5e-2)

    print("KERNEL_OK")
</pallas_src>

<mosaic_0001>
module attributes {stable_mosaic.version = 11 : i64} {
  func.func @_glu_kernel_resident(%arg0: i32, %arg1: memref<16x128xbf16, #tpu.memory_space<vmem>>, %arg2: memref<128x1024xbf16, #tpu.memory_space<vmem>>, %arg3: memref<1x1024xf32, #tpu.memory_space<vmem>>, %arg4: memref<16x512xf32, #tpu.memory_space<vmem>>) attributes {dimension_semantics = [#tpu.dimension_semantics<parallel>], iteration_bounds = array<i64: 1>, scalar_prefetch = 0 : i64, scratch_operands = 0 : i64, tpu.core_type = #tpu.core_type<tc>, window_params = [{transform_indices = @transform_0, window_bounds = array<i64: 16, 128>}, {pipeline_mode = #tpu.pipeline_mode<synchronous>, transform_indices = @transform_1, window_bounds = array<i64: 128, 1024>}, {pipeline_mode = #tpu.pipeline_mode<synchronous>, transform_indices = @transform_2, window_bounds = array<i64: 1, 1024>}, {transform_indices = @transform_3, window_bounds = array<i64: 16, 512>}]} {
    %c0 = arith.constant 0 : index
    %c0_0 = arith.constant 0 : index
    %0 = vector.load %arg1[%c0, %c0_0] : memref<16x128xbf16, #tpu.memory_space<vmem>>, vector<16x128xbf16>
    %c0_1 = arith.constant 0 : index
    %c0_2 = arith.constant 0 : index
    %1 = vector.load %arg2[%c0_1, %c0_2] : memref<128x1024xbf16, #tpu.memory_space<vmem>>, vector<128x1024xbf16>
    %cst = arith.constant dense<0.000000e+00> : vector<16x1024xf32>
    %2 = tpu.matmul %0, %1, %cst {dimension_numbers = #tpu.dot_dimension_numbers<[1], [0], [0], [1], [0, 0, 1, 1], [], []>} : vector<16x128xbf16>, vector<128x1024xbf16>, vector<16x1024xf32> -> vector<16x1024xf32>
    %c0_3 = arith.constant 0 : index
    %c0_4 = arith.constant 0 : index
    %3 = vector.load %arg3[%c0_3, %c0_4] : memref<1x1024xf32, #tpu.memory_space<vmem>>, vector<1x1024xf32>
    %4 = vector.broadcast %3 : vector<1x1024xf32> to vector<16x1024xf32>
    %5 = arith.addf %2, %4 : vector<16x1024xf32>
    %6 = vector.extract_strided_slice %5 {offsets = [0, 0], sizes = [16, 512], strides = [1, 1]} : vector<16x1024xf32> to vector<16x512xf32>
    %7 = vector.extract_strided_slice %5 {offsets = [0, 512], sizes = [16, 512], strides = [1, 1]} : vector<16x1024xf32> to vector<16x512xf32>
    %cst_5 = arith.constant 0.000000e+00 : f32
    %8 = vector.broadcast %cst_5 : f32 to vector<16x512xf32>
    %9 = arith.subf %8, %7 : vector<16x512xf32>
    %10 = math.exp %9 : vector<16x512xf32>
    %cst_6 = arith.constant 1.000000e+00 : f32
    %11 = vector.broadcast %cst_6 : f32 to vector<16x512xf32>
    %12 = arith.addf %11, %10 : vector<16x512xf32>
    %13 = tpu.reciprocal %12 {approx = true} : vector<16x512xf32> -> vector<16x512xf32>
    %14 = arith.mulf %6, %13 : vector<16x512xf32>
    %c0_7 = arith.constant 0 : index
    %c0_8 = arith.constant 0 : index
    %15 = vector.load %arg4[%c0_7, %c0_8] : memref<16x512xf32, #tpu.memory_space<vmem>>, vector<16x512xf32>
    tpu.vector_store %arg4[%c0_7, %c0_8], %14 {strides = array<i32>} : memref<16x512xf32, #tpu.memory_space<vmem>>, vector<16x512xf32>,
    return
  }
  func.func @transform_0(%arg0: i32) -> (i32, i32) {
    %c0_i32 = arith.constant 0 : i32
    %c0_i32_0 = arith.constant 0 : i32
    return %arg0, %c0_i32 : i32, i32
  }
  func.func @transform_1(%arg0: i32) -> (i32, i32) {
    %c0_i32 = arith.constant 0 : i32
    %c0_i32_0 = arith.constant 0 : i32
    %c0_i32_1 = arith.constant 0 : i32
    return %c0_i32, %c0_i32_0 : i32, i32
  }
  func.func @transform_2(%arg0: i32) -> (i32, i32) {
    %c0_i32 = arith.constant 0 : i32
    %c0_i32_0 = arith.constant 0 : i32
    %c0_i32_1 = arith.constant 0 : i32
    return %c0_i32, %c0_i32_0 : i32, i32
  }
  func.func @transform_3(%arg0: i32) -> (i32, i32) {
    %c0_i32 = arith.constant 0 : i32
    %c0_i32_0 = arith.constant 0 : i32
    return %arg0, %c0_i32 : i32, i32
  }
}

</mosaic_0001>

<llo_original>
// kernel: tpu_custom_call.1
$region0: #{tpu_custom_call.1}
  #allocation0 [shape = 'u32[]', space=smem, size = 0x4, offset = 0x4, fixed_abs, tag = 'smem constant byte address 0x4 - core index']
  #allocation1 [shape = 'u32[144,128]{1,0:T(1,128)}', space=vmem, size = 0x12000, scoped, tag = 'internal scratch']
  %s0 = inlined_call_operand.hbm [shape: bf16[16,128], index: 0, kind: input, shape index: {}]
  %s1 = inlined_call_operand.hbm [shape: bf16[128,1024], index: 1, kind: input, shape index: {}]
  %s2 = inlined_call_operand.hbm [shape: f32[1,1024], index: 2, kind: input, shape index: {}]
  %s3 = inlined_call_operand.hbm [shape: f32[16,512], index: 3, kind: output, shape index: {}]
  %s4 = sld [smem:[#allocation0]]
  $region34: #{tpu_custom_call.1} parent=0
    _
  %s6 = ssub.s32 1, %s4
  %s7 = scalar_select 0, %s6, %s4
  $region1: #{tpu_custom_call.1} parent=0
    #allocation2 [shape = 'u8[4096]{0}', space=vmem, size = 0x1000, scoped, tag = 'input window, operand 0, single buffered']
    #allocation3 [shape = 's32[1]{0}', space=sflag, size = 0x4, scoped, tag = 'scoped memory for tpu_custom_call.1']
    #allocation4 [shape = 's32[1]{0}', space=sflag, size = 0x4, scoped, tag = 'scoped memory for tpu_custom_call.1']
    #allocation5 [shape = 'u8[262144]{0}', space=vmem, size = 0x40000, scoped, tag = 'input window, operand 1, single buffered']
    #allocation6 [shape = 's32[1]{0}', space=sflag, size = 0x4, scoped, tag = 'scoped memory for tpu_custom_call.1']
    #allocation7 [shape = 'u8[4096]{0}', space=vmem, size = 0x1000, scoped, tag = 'input window, operand 2, single buffered']
    #allocation8 [shape = 'u8[32768]{0}', space=vmem, size = 0x8000, scoped, tag = 'output window, operand 0, single buffered']
    %8 = vsyncpa [#allocation3], 0
    %9 = vsyncpa [#allocation6], 0
    %10 = vsyncpa [#allocation4], 0
    // Predicated region
    $region2: #{tpu_custom_call.1} parent=1 // pred_check
      _
    $region3: #{tpu_custom_call.1} parent=1 // pred_check_branch
      %12 = sbr.rel (0) target = $region5
    $region4: #{tpu_custom_call.1} parent=1 // pred_region
      %s14 = ssub.s32 128, 128
      %15 = vsyncadd [#allocation3], %s14
      %s16 = sshll.u32 [#allocation2], 4
      %s17 = int_to_ptr.vmem [resolvable:$true] %s16
      %22 = dma.hbm_to_vmem [thread:$0]  %s0, 128, %s17, [#allocation3], 64, 64, 4
    $region5: #{tpu_custom_call.1} parent=1 // pred_fallthru
      _
    // Predicated region
    $region6: #{tpu_custom_call.1} parent=1 // pred_check
      _
    $region7: #{tpu_custom_call.1} parent=1 // pred_check_branch
      %24 = sbr.rel (0) target = $region9
    $region8: #{tpu_custom_call.1} parent=1 // pred_region
      %s26 = ssub.s32 8192, 8192
      %27 = vsyncadd [#allocation6], %s26
      %s28 = sshll.u32 [#allocation5], 4
      %s29 = int_to_ptr.vmem [resolvable:$true] %s28
      %34 = dma.hbm_to_vmem [thread:$0]  %s1, 8192, %s29, [#allocation6], 512, 512, 32
    $region9: #{tpu_custom_call.1} parent=1 // pred_fallthru
      _
    // Predicated region
    $region10: #{tpu_custom_call.1} parent=1 // pred_check
      _
    $region11: #{tpu_custom_call.1} parent=1 // pred_check_branch
      %36 = sbr.rel (0) target = $region13
    $region12: #{tpu_custom_call.1} parent=1 // pred_region
      %s38 = ssub.s32 128, 128
      %39 = vsyncadd [#allocation6], %s38
      %s41 = sshll.u32 [#allocation7], 4
      %s42 = int_to_ptr.vmem [resolvable:$true] %s41
      %44 = dma.hbm_to_vmem [thread:$0]  %s2, 128, %s42, [#allocation6]
    $region13: #{tpu_custom_call.1} parent=1 // pred_fallthru
      _
    // Predicated region
    $region14: #{tpu_custom_call.1} parent=1 // pred_check
      _
    $region15: #{tpu_custom_call.1} parent=1 // pred_check_branch
      %46 = sbr.rel (0) target = $region17
    $region16: #{tpu_custom_call.1} parent=1 // pred_region
      %47 = dma.done [#allocation3], 128
    $region17: #{tpu_custom_call.1} parent=1 // pred_fallthru
      _
    // Predicated region
    $region18: #{tpu_custom_call.1} parent=1 // pred_check
      _
    $region19: #{tpu_custom_call.1} parent=1 // pred_check_branch
      %49 = sbr.rel (0) target = $region21
    $region20: #{tpu_custom_call.1} parent=1 // pred_region
      %50 = dma.done [#allocation6], 8192
    $region21: #{tpu_custom_call.1} parent=1 // pred_fallthru
      _
    // Predicated region
    $region22: #{tpu_custom_call.1} parent=1 // pred_check
      _
    $region23: #{tpu_custom_call.1} parent=1 // pred_check_branch
      %52 = sbr.rel (0) target = $region25
    $region24: #{tpu_custom_call.1} parent=1 // pred_region
      %53 = dma.done [#allocation6], 128
    $region25: #{tpu_custom_call.1} parent=1 // pred_fallthru
      _
    %v55 = vld [vmem:[#allocation2] sm:$0xf]
    %v56 = vld [vmem:[#allocation2 + $0x4] sm:$0xf]
    %v57 = vld [vmem:[#allocation5] sm:$0xff]
    %v58 = vld [vmem:[#allocation5 + $0x8] sm:$0xff]
    %v59 = vld [vmem:[#allocation5 + $0x10] sm:$0xff]
    %v60 = vld [vmem:[#allocation5 + $0x18] sm:$0xff]
    %v61 = vld [vmem:[#allocation5 + $0x20] sm:$0xff]
    %v62 = vld [vmem:[#allocation5 + $0x28] sm:$0xff]
    %v63 = vld [vmem:[#allocation5 + $0x30] sm:$0xff]
    %v64 = vld [vmem:[#allocation5 + $0x38] sm:$0xff]
    %v65 = vld [vmem:[#allocation5 + $0x40] sm:$0xff]
    %v66 = vld [vmem:[#allocation5 + $0x48] sm:$0xff]
    %v67 = vld [vmem:[#allocation5 + $0x50] sm:$0xff]
    %v68 = vld [vmem:[#allocation5 + $0x58] sm:$0xff]
    %v69 = vld [vmem:[#allocation5 + $0x60] sm:$0xff]
    %v70 = vld [vmem:[#allocation5 + $0x68] sm:$0xff]
    %v71 = vld [vmem:[#allocation5 + $0x70] sm:$0xff]
    %v72 = vld [vmem:[#allocation5 + $0x78] sm:$0xff]
    %v73 = vld [vmem:[#allocation5 + $0x80] sm:$0xff]
    %v74 = vld [vmem:[#allocation5 + $0x88] sm:$0xff]
    %v75 = vld [vmem:[#allocation5 + $0x90] sm:$0xff]
    %v76 = vld [vmem:[#allocation5 + $0x98] sm:$0xff]
    %v77 = vld [vmem:[#allocation5 + $0xa0] sm:$0xff]
    %v78 = vld [vmem:[#allocation5 + $0xa8] sm:$0xff]
    %v79 = vld [vmem:[#allocation5 + $0xb0] sm:$0xff]
    %v80 = vld [vmem:[#allocation5 + $0xb8] sm:$0xff]
    %v81 = vld [vmem:[#allocation5 + $0xc0] sm:$0xff]
    %v82 = vld [vmem:[#allocation5 + $0xc8] sm:$0xff]
    %v83 = vld [vmem:[#allocation5 + $0xd0] sm:$0xff]
    %v84 = vld [vmem:[#allocation5 + $0xd8] sm:$0xff]
    %v85 = vld [vmem:[#allocation5 + $0xe0] sm:$0xff]
    %v86 = vld [vmem:[#allocation5 + $0xe8] sm:$0xff]
    %v87 = vld [vmem:[#allocation5 + $0xf0] sm:$0xff]
    %v88 = vld [vmem:[#allocation5 + $0xf8] sm:$0xff]
    %v89 = vld [vmem:[#allocation5 + $0x100] sm:$0xff]
    %v90 = vld [vmem:[#allocation5 + $0x108] sm:$0xff]
    %v91 = vld [vmem:[#allocation5 + $0x110] sm:$0xff]
    %v92 = vld [vmem:[#allocation5 + $0x118] sm:$0xff]
    %v93 = vld [vmem:[#allocation5 + $0x120] sm:$0xff]
    %v94 = vld [vmem:[#allocation5 + $0x128] sm:$0xff]
    %v95 = vld [vmem:[#allocation5 + $0x130] sm:$0xff]
    %v96 = vld [vmem:[#allocation5 + $0x138] sm:$0xff]
    %v97 = vld [vmem:[#allocation5 + $0x140] sm:$0xff]
    %v98 = vld [vmem:[#allocation5 + $0x148] sm:$0xff]
    %v99 = vld [vmem:[#allocation5 + $0x150] sm:$0xff]
    %v100 = vld [vmem:[#allocation5 + $0x158] sm:$0xff]
    %v101 = vld [vmem:[#allocation5 + $0x160] sm:$0xff]
    %v102 = vld [vmem:[#allocation5 + $0x168] sm:$0xff]
    %v103 = vld [vmem:[#allocation5 + $0x170] sm:$0xff]
    %v104 = vld [vmem:[#allocation5 + $0x178] sm:$0xff]
    %v105 = vld [vmem:[#allocation5 + $0x180] sm:$0xff]
    %v106 = vld [vmem:[#allocation5 + $0x188] sm:$0xff]
    %v107 = vld [vmem:[#allocation5 + $0x190] sm:$0xff]
    %v108 = vld [vmem:[#allocation5 + $0x198] sm:$0xff]
    %v109 = vld [vmem:[#allocation5 + $0x1a0] sm:$0xff]
    %v110 = vld [vmem:[#allocation5 + $0x1a8] sm:$0xff]
    %v111 = vld [vmem:[#allocation5 + $0x1b0] sm:$0xff]
    %v112 = vld [vmem:[#allocation5 + $0x1b8] sm:$0xff]
    %v113 = vld [vmem:[#allocation5 + $0x1c0] sm:$0xff]
    %v114 = vld [vmem:[#allocation5 + $0x1c8] sm:$0xff]
    %v115 = vld [vmem:[#allocation5 + $0x1d0] sm:$0xff]
    %v116 = vld [vmem:[#allocation5 + $0x1d8] sm:$0xff]
    %v117 = vld [vmem:[#allocation5 + $0x1e0] sm:$0xff]
    %v118 = vld [vmem:[#allocation5 + $0x1e8] sm:$0xff]
    %v119 = vld [vmem:[#allocation5 + $0x1f0] sm:$0xff]
    %v120 = vld [vmem:[#allocation5 + $0x1f8] sm:$0xff]
    %v121 = vld [vmem:[#allocation7] sm:$0xff]
    %v123 = vlaneseq
    %v124 = vshrl.u32 %v123, 7
    %v125 = vsub.s32 0, %v124
    %v126 = vrot.slane %v121, %v125
    %v127 = vlaneseq
    %v128 = vshrl.u32 %v127, 7
    %v129 = vsub.s32 1, %v128
    %v130 = vrot.slane %v121, %v129
    %v131 = vlaneseq
    %v132 = vshrl.u32 %v131, 7
    %v133 = vsub.s32 2, %v132
    %v134 = vrot.slane %v121, %v133
    %v135 = vlaneseq
    %v136 = vshrl.u32 %v135, 7
    %v137 = vsub.s32 3, %v136
    %v138 = vrot.slane %v121, %v137
    %v139 = vlaneseq
    %v140 = vshrl.u32 %v139, 7
    %v141 = vsub.s32 4, %v140
    %v142 = vrot.slane %v121, %v141
    %v143 = vlaneseq
    %v144 = vshrl.u32 %v143, 7
    %v145 = vsub.s32 5, %v144
    %v146 = vrot.slane %v121, %v145
    %v147 = vlaneseq
    %v148 = vshrl.u32 %v147, 7
    %v149 = vsub.s32 6, %v148
    %v150 = vrot.slane %v121, %v149
    %v151 = vlaneseq
    %v152 = vshrl.u32 %v151, 7
    %v153 = vsub.s32 7, %v152
    %v154 = vrot.slane %v121, %v153
    %v165 = vunpack.c.l.b16 %v55
    %v166 = vunpack.c.l.b16 %v56
    %v167 = vpack.c.b16 %v166, %v165
    %v233 = vunpack.c.l.b16 %v57
    %v234 = vunpack.c.h.b16 %v57
    %v235 = vunpack.c.l.b16 %v58
    %v236 = vunpack.c.h.b16 %v58
    %v237 = vunpack.c.l.b16 %v59
    %v238 = vunpack.c.h.b16 %v59
    %v239 = vunpack.c.l.b16 %v60
    %v240 = vunpack.c.h.b16 %v60
    %v241 = vunpack.c.l.b16 %v61
    %v242 = vunpack.c.h.b16 %v61
    %v243 = vunpack.c.l.b16 %v62
    %v244 = vunpack.c.h.b16 %v62
    %v245 = vunpack.c.l.b16 %v63
    %v246 = vunpack.c.h.b16 %v63
    %v247 = vunpack.c.l.b16 %v64
    %v248 = vunpack.c.h.b16 %v64
    %v249 = vunpack.c.l.b16 %v65
    %v250 = vunpack.c.h.b16 %v65
    %v251 = vunpack.c.l.b16 %v66
    %v252 = vunpack.c.h.b16 %v66
    %v253 = vunpack.c.l.b16 %v67
    %v254 = vunpack.c.h.b16 %v67
    %v255 = vunpack.c.l.b16 %v68
    %v256 = vunpack.c.h.b16 %v68
    %v257 = vunpack.c.l.b16 %v69
    %v258 = vunpack.c.h.b16 %v69
    %v259 = vunpack.c.l.b16 %v70
    %v260 = vunpack.c.h.b16 %v70
    %v261 = vunpack.c.l.b16 %v71
    %v262 = vunpack.c.h.b16 %v71
    %v263 = vunpack.c.l.b16 %v72
    %v264 = vunpack.c.h.b16 %v72
    %v265 = vunpack.c.l.b16 %v73
    %v266 = vunpack.c.h.b16 %v73
    %v267 = vunpack.c.l.b16 %v74
    %v268 = vunpack.c.h.b16 %v74
    %v269 = vunpack.c.l.b16 %v75
    %v270 = vunpack.c.h.b16 %v75
    %v271 = vunpack.c.l.b16 %v76
    %v272 = vunpack.c.h.b16 %v76
    %v273 = vunpack.c.l.b16 %v77
    %v274 = vunpack.c.h.b16 %v77
    %v275 = vunpack.c.l.b16 %v78
    %v276 = vunpack.c.h.b16 %v78
    %v277 = vunpack.c.l.b16 %v79
    %v278 = vunpack.c.h.b16 %v79
    %v279 = vunpack.c.l.b16 %v80
    %v280 = vunpack.c.h.b16 %v80
    %v281 = vunpack.c.l.b16 %v81
    %v282 = vunpack.c.h.b16 %v81
    %v283 = vunpack.c.l.b16 %v82
    %v284 = vunpack.c.h.b16 %v82
    %v285 = vunpack.c.l.b16 %v83
    %v286 = vunpack.c.h.b16 %v83
    %v287 = vunpack.c.l.b16 %v84
    %v288 = vunpack.c.h.b16 %v84
    %v289 = vunpack.c.l.b16 %v85
    %v290 = vunpack.c.h.b16 %v85
    %v291 = vunpack.c.l.b16 %v86
    %v292 = vunpack.c.h.b16 %v86
    %v293 = vunpack.c.l.b16 %v87
    %v294 = vunpack.c.h.b16 %v87
    %v295 = vunpack.c.l.b16 %v88
    %v296 = vunpack.c.h.b16 %v88
    %v297 = vunpack.c.l.b16 %v89
    %v298 = vunpack.c.h.b16 %v89
    %v299 = vunpack.c.l.b16 %v90
    %v300 = vunpack.c.h.b16 %v90
    %v301 = vunpack.c.l.b16 %v91
    %v302 = vunpack.c.h.b16 %v91
    %v303 = vunpack.c.l.b16 %v92
    %v304 = vunpack.c.h.b16 %v92
    %v305 = vunpack.c.l.b16 %v93
    %v306 = vunpack.c.h.b16 %v93
    %v307 = vunpack.c.l.b16 %v94
    %v308 = vunpack.c.h.b16 %v94
    %v309 = vunpack.c.l.b16 %v95
    %v310 = vunpack.c.h.b16 %v95
    %v311 = vunpack.c.l.b16 %v96
    %v312 = vunpack.c.h.b16 %v96
    %v313 = vunpack.c.l.b16 %v97
    %v314 = vunpack.c.h.b16 %v97
    %v315 = vunpack.c.l.b16 %v98
    %v316 = vunpack.c.h.b16 %v98
    %v317 = vunpack.c.l.b16 %v99
    %v318 = vunpack.c.h.b16 %v99
    %v319 = vunpack.c.l.b16 %v100
    %v320 = vunpack.c.h.b16 %v100
    %v321 = vunpack.c.l.b16 %v101
    %v322 = vunpack.c.h.b16 %v101
    %v323 = vunpack.c.l.b16 %v102
    %v324 = vunpack.c.h.b16 %v102
    %v325 = vunpack.c.l.b16 %v103
    %v326 = vunpack.c.h.b16 %v103
    %v327 = vunpack.c.l.b16 %v104
    %v328 = vunpack.c.h.b16 %v104
    %v329 = vunpack.c.l.b16 %v105
    %v330 = vunpack.c.h.b16 %v105
    %v331 = vunpack.c.l.b16 %v106
    %v332 = vunpack.c.h.b16 %v106
    %v333 = vunpack.c.l.b16 %v107
    %v334 = vunpack.c.h.b16 %v107
    %v335 = vunpack.c.l.b16 %v108
    %v336 = vunpack.c.h.b16 %v108
    %v337 = vunpack.c.l.b16 %v109
    %v338 = vunpack.c.h.b16 %v109
    %v339 = vunpack.c.l.b16 %v110
    %v340 = vunpack.c.h.b16 %v110
    %v341 = vunpack.c.l.b16 %v111
    %v342 = vunpack.c.h.b16 %v111
    %v343 = vunpack.c.l.b16 %v112
    %v344 = vunpack.c.h.b16 %v112
    %v345 = vunpack.c.l.b16 %v113
    %v346 = vunpack.c.h.b16 %v113
    %v347 = vunpack.c.l.b16 %v114
    %v348 = vunpack.c.h.b16 %v114
    %v349 = vunpack.c.l.b16 %v115
    %v350 = vunpack.c.h.b16 %v115
    %v351 = vunpack.c.l.b16 %v116
    %v352 = vunpack.c.h.b16 %v116
    %v353 = vunpack.c.l.b16 %v117
    %v354 = vunpack.c.h.b16 %v117
    %v355 = vunpack.c.l.b16 %v118
    %v356 = vunpack.c.h.b16 %v118
    %v357 = vunpack.c.l.b16 %v119
    %v358 = vunpack.c.h.b16 %v119
    %v359 = vunpack.c.l.b16 %v120
    %v360 = vunpack.c.h.b16 %v120
    %v361 = vpack.c.b16 %v241, %v233
    %v362 = vpack.c.b16 %v242, %v234
    %v363 = vpack.c.b16 %v243, %v235
    %v364 = vpack.c.b16 %v244, %v236
    %v365 = vpack.c.b16 %v245, %v237
    %v366 = vpack.c.b16 %v246, %v238
    %v367 = vpack.c.b16 %v247, %v239
    %v368 = vpack.c.b16 %v248, %v240
    %v369 = vpack.c.b16 %v257, %v249
    %v370 = vpack.c.b16 %v258, %v250
    %v371 = vpack.c.b16 %v259, %v251
    %v372 = vpack.c.b16 %v260, %v252
    %v373 = vpack.c.b16 %v261, %v253
    %v374 = vpack.c.b16 %v262, %v254
    %v375 = vpack.c.b16 %v263, %v255
    %v376 = vpack.c.b16 %v264, %v256
    %v377 = vpack.c.b16 %v273, %v265
    %v378 = vpack.c.b16 %v274, %v266
    %v379 = vpack.c.b16 %v275, %v267
    %v380 = vpack.c.b16 %v276, %v268
    %v381 = vpack.c.b16 %v277, %v269
    %v382 = vpack.c.b16 %v278, %v270
    %v383 = vpack.c.b16 %v279, %v271
    %v384 = vpack.c.b16 %v280, %v272
    %v385 = vpack.c.b16 %v289, %v281
    %v386 = vpack.c.b16 %v290, %v282
    %v387 = vpack.c.b16 %v291, %v283
    %v388 = vpack.c.b16 %v292, %v284
    %v389 = vpack.c.b16 %v293, %v285
    %v390 = vpack.c.b16 %v294, %v286
    %v391 = vpack.c.b16 %v295, %v287
    %v392 = vpack.c.b16 %v296, %v288
    %v393 = vpack.c.b16 %v305, %v297
    %v394 = vpack.c.b16 %v306, %v298
    %v395 = vpack.c.b16 %v307, %v299
    %v396 = vpack.c.b16 %v308, %v300
    %v397 = vpack.c.b16 %v309, %v301
    %v398 = vpack.c.b16 %v310, %v302
    %v399 = vpack.c.b16 %v311, %v303
    %v400 = vpack.c.b16 %v312, %v304
    %v401 = vpack.c.b16 %v321, %v313
    %v402 = vpack.c.b16 %v322, %v314
    %v403 = vpack.c.b16 %v323, %v315
    %v404 = vpack.c.b16 %v324, %v316
    %v405 = vpack.c.b16 %v325, %v317
    %v406 = vpack.c.b16 %v326, %v318
    %v407 = vpack.c.b16 %v327, %v319
    %v408 = vpack.c.b16 %v328, %v320
    %v409 = vpack.c.b16 %v337, %v329
    %v410 = vpack.c.b16 %v338, %v330
    %v411 = vpack.c.b16 %v339, %v331
    %v412 = vpack.c.b16 %v340, %v332
    %v413 = vpack.c.b16 %v341, %v333
    %v414 = vpack.c.b16 %v342, %v334
    %v415 = vpack.c.b16 %v343, %v335
    %v416 = vpack.c.b16 %v344, %v336
    %v417 = vpack.c.b16 %v353, %v345
    %v418 = vpack.c.b16 %v354, %v346
    %v419 = vpack.c.b16 %v355, %v347
    %v420 = vpack.c.b16 %v356, %v348
    %v421 = vpack.c.b16 %v357, %v349
    %v422 = vpack.c.b16 %v358, %v350
    %v423 = vpack.c.b16 %v359, %v351
    %v424 = vpack.c.b16 %v360, %v352
    %489 = vmatprep.subr.bf16.mxu0 %v418
    %490 = vmatpush1.bf16.msra.mxu0 %v417
    %491 = vmatprep.subr.bf16.mxu0 %v410
    %492 = vmatpush1.bf16.msra.mxu0 %v409
    %493 = vmatprep.subr.bf16.mxu0 %v402
    %494 = vmatpush1.bf16.msra.mxu0 %v401
    %495 = vmatprep.subr.bf16.mxu0 %v394
    %496 = vmatpush1.bf16.msra.mxu0 %v393
    %497 = vmatprep.subr.bf16.mxu0 %v386
    %498 = vmatpush1.bf16.msra.mxu0 %v385
    %499 = vmatprep.subr.bf16.mxu0 %v378
    %500 = vmatpush1.bf16.msra.mxu0 %v377
    %501 = vmatprep.subr.bf16.mxu0 %v370
    %502 = vmatpush1.bf16.msra.mxu0 %v369
    %503 = vmatprep.subr.bf16.mxu0 %v362
    %504 = vmatpush1.bf16.msra.mxu0 %v361
    %505 = vmatprep.subr.bf16.mxu0 0
    %506 = vmatpush2.bf16.msra.mxu0 0
    %507 = vmatprep.subr.bf16.mxu0 0
    %508 = vmatpush2.bf16.msra.mxu0 0
    %509 = vmatprep.subr.bf16.mxu0 0
    %510 = vmatpush2.bf16.msra.mxu0 0
    %511 = vmatprep.subr.bf16.mxu0 0
    %512 = vmatpush2.bf16.msra.mxu0 0
    %513 = vmatprep.subr.bf16.mxu0 0
    %514 = vmatpush2.bf16.msra.mxu0 0
    %515 = vmatprep.subr.bf16.mxu0 0
    %516 = vmatpush2.bf16.msra.mxu0 0
    %517 = vmatprep.subr.bf16.mxu0 0
    %518 = vmatpush2.bf16.msra.mxu0 0
    %519 = vmatprep.subr.bf16.mxu0 0
    %520 = vmatpush2.bf16.msra.mxu0 0
    %521 = vmatprep.mubr.bf16.mxu0 0
    %522 = vmatmul.mubr.bf16.gmra.mxu0 %v167
    %v523 = vpop.f32.mrf.mxu0
    %v524 = vadd.f32 %v126, %v523
    %v525 = vpop.f32.mrf.mxu0
    %v526 = vadd.f32 %v130, %v525
    %v527 = vpop.f32.mrf.mxu0
    %v528 = vadd.f32 %v126, %v527
    %v529 = vpop.f32.mrf.mxu0
    %v530 = vadd.f32 %v130, %v529
    %531 = vdwg.mxu0
    %532 = vmatprep.subr.bf16.mxu0 %v420
    %533 = vmatpush1.bf16.msra.mxu0 %v419
    %534 = vmatprep.subr.bf16.mxu0 %v412
    %535 = vmatpush1.bf16.msra.mxu0 %v411
    %536 = vmatprep.subr.bf16.mxu0 %v404
    %537 = vmatpush1.bf16.msra.mxu0 %v403
    %538 = vmatprep.subr.bf16.mxu0 %v396
    %539 = vmatpush1.bf16.msra.mxu0 %v395
    %540 = vmatprep.subr.bf16.mxu0 %v388
    %541 = vmatpush1.bf16.msra.mxu0 %v387
    %542 = vmatprep.subr.bf16.mxu0 %v380
    %543 = vmatpush1.bf16.msra.mxu0 %v379
    %544 = vmatprep.subr.bf16.mxu0 %v372
    %545 = vmatpush1.bf16.msra.mxu0 %v371
    %546 = vmatprep.subr.bf16.mxu0 %v364
    %547 = vmatpush1.bf16.msra.mxu0 %v363
    %548 = vmatprep.subr.bf16.mxu0 0
    %549 = vmatpush2.bf16.msra.mxu0 0
    %550 = vmatprep.subr.bf16.mxu0 0
    %551 = vmatpush2.bf16.msra.mxu0 0
    %552 = vmatprep.subr.bf16.mxu0 0
    %553 = vmatpush2.bf16.msra.mxu0 0
    %554 = vmatprep.subr.bf16.mxu0 0
    %555 = vmatpush2.bf16.msra.mxu0 0
    %556 = vmatprep.subr.bf16.mxu0 0
    %557 = vmatpush2.bf16.msra.mxu0 0
    %558 = vmatprep.subr.bf16.mxu0 0
    %559 = vmatpush2.bf16.msra.mxu0 0
    %560 = vmatprep.subr.bf16.mxu0 0
    %561 = vmatpush2.bf16.msra.mxu0 0
    %562 = vmatprep.subr.bf16.mxu0 0
    %563 = vmatpush2.bf16.msra.mxu0 0
    %564 = vmatprep.mubr.bf16.mxu0 0
    %565 = vmatmul.mubr.bf16.gmra.mxu0 %v167
    %v566 = vpop.f32.mrf.mxu0
    %v567 = vadd.f32 %v134, %v566
    %v568 = vpop.f32.mrf.mxu0
    %v569 = vadd.f32 %v138, %v568
    %v570 = vpop.f32.mrf.mxu0
    %v571 = vadd.f32 %v134, %v570
    %v572 = vpop.f32.mrf.mxu0
    %v573 = vadd.f32 %v138, %v572
    %574 = vdwg.mxu0
    %575 = vmatprep.subr.bf16.mxu0 %v422
    %576 = vmatpush1.bf16.msra.mxu0 %v421
    %577 = vmatprep.subr.bf16.mxu0 %v414
    %578 = vmatpush1.bf16.msra.mxu0 %v413
    %579 = vmatprep.subr.bf16.mxu0 %v406
    %580 = vmatpush1.bf16.msra.mxu0 %v405
    %581 = vmatprep.subr.bf16.mxu0 %v398
    %582 = vmatpush1.bf16.msra.mxu0 %v397
    %583 = vmatprep.subr.bf16.mxu0 %v390
    %584 = vmatpush1.bf16.msra.mxu0 %v389
    %585 = vmatprep.subr.bf16.mxu0 %v382
    %586 = vmatpush1.bf16.msra.mxu0 %v381
    %587 = vmatprep.subr.bf16.mxu0 %v374
    %588 = vmatpush1.bf16.msra.mxu0 %v373
    %589 = vmatprep.subr.bf16.mxu0 %v366
    %590 = vmatpush1.bf16.msra.mxu0 %v365
    %591 = vmatprep.subr.bf16.mxu0 0
    %592 = vmatpush2.bf16.msra.mxu0 0
    %593 = vmatprep.subr.bf16.mxu0 0
    %594 = vmatpush2.bf16.msra.mxu0 0
    %595 = vmatprep.subr.bf16.mxu0 0
    %596 = vmatpush2.bf16.msra.mxu0 0
    %597 = vmatprep.subr.bf16.mxu0 0
    %598 = vmatpush2.bf16.msra.mxu0 0
    %599 = vmatprep.subr.bf16.mxu0 0
    %600 = vmatpush2.bf16.msra.mxu0 0
    %601 = vmatprep.subr.bf16.mxu0 0
    %602 = vmatpush2.bf16.msra.mxu0 0
    %603 = vmatprep.subr.bf16.mxu0 0
    %604 = vmatpush2.bf16.msra.mxu0 0
    %605 = vmatprep.subr.bf16.mxu0 0
    %606 = vmatpush2.bf16.msra.mxu0 0
    %607 = vmatprep.mubr.bf16.mxu0 0
    %608 = vmatmul.mubr.bf16.gmra.mxu0 %v167
    %v609 = vpop.f32.mrf.mxu0
    %v610 = vadd.f32 %v142, %v609
    %v611 = vpop.f32.mrf.mxu0
    %v612 = vadd.f32 %v146, %v611
    %v613 = vpop.f32.mrf.mxu0
    %v614 = vadd.f32 %v142, %v613
    %v615 = vpop.f32.mrf.mxu0
    %v616 = vadd.f32 %v146, %v615
    %617 = vdwg.mxu0
    %618 = vmatprep.subr.bf16.mxu0 %v424
    %619 = vmatpush1.bf16.msra.mxu0 %v423
    %620 = vmatprep.subr.bf16.mxu0 %v416
    %621 = vmatpush1.bf16.msra.mxu0 %v415
    %622 = vmatprep.subr.bf16.mxu0 %v408
    %623 = vmatpush1.bf16.msra.mxu0 %v407
    %624 = vmatprep.subr.bf16.mxu0 %v400
    %625 = vmatpush1.bf16.msra.mxu0 %v399
    %626 = vmatprep.subr.bf16.mxu0 %v392
    %627 = vmatpush1.bf16.msra.mxu0 %v391
    %628 = vmatprep.subr.bf16.mxu0 %v384
    %629 = vmatpush1.bf16.msra.mxu0 %v383
    %630 = vmatprep.subr.bf16.mxu0 %v376
    %631 = vmatpush1.bf16.msra.mxu0 %v375
    %632 = vmatprep.subr.bf16.mxu0 %v368
    %633 = vmatpush1.bf16.msra.mxu0 %v367
    %634 = vmatprep.subr.bf16.mxu0 0
    %635 = vmatpush2.bf16.msra.mxu0 0
    %636 = vmatprep.subr.bf16.mxu0 0
    %637 = vmatpush2.bf16.msra.mxu0 0
    %638 = vmatprep.subr.bf16.mxu0 0
    %639 = vmatpush2.bf16.msra.mxu0 0
    %640 = vmatprep.subr.bf16.mxu0 0
    %641 = vmatpush2.bf16.msra.mxu0 0
    %642 = vmatprep.subr.bf16.mxu0 0
    %643 = vmatpush2.bf16.msra.mxu0 0
    %644 = vmatprep.subr.bf16.mxu0 0
    %645 = vmatpush2.bf16.msra.mxu0 0
    %646 = vmatprep.subr.bf16.mxu0 0
    %647 = vmatpush2.bf16.msra.mxu0 0
    %648 = vmatprep.subr.bf16.mxu0 0
    %649 = vmatpush2.bf16.msra.mxu0 0
    %650 = vmatprep.mubr.bf16.mxu0 0
    %651 = vmatmul.mubr.bf16.gmra.mxu0 %v167
    %v652 = vpop.f32.mrf.mxu0
    %v653 = vadd.f32 %v150, %v652
    %v654 = vpop.f32.mrf.mxu0
    %v655 = vadd.f32 %v154, %v654
    %v656 = vpop.f32.mrf.mxu0
    %v657 = vadd.f32 %v150, %v656
    %v658 = vpop.f32.mrf.mxu0
    %v659 = vadd.f32 %v154, %v658
    %660 = vdwg.mxu0
    %v661 = vsub.f32 0.0, %v610
    %v662 = vsub.f32 0.0, %v612
    %v663 = vsub.f32 0.0, %v653
    %v664 = vsub.f32 0.0, %v655
    %v665 = vsub.f32 0.0, %v614
    %v666 = vsub.f32 0.0, %v616
    %v667 = vsub.f32 0.0, %v657
    %v668 = vsub.f32 0.0, %v659
    %v669 = vmul.f32 %v661, 1.442695
    %v670 = vpow.pop %v669
    %v671 = vmul.f32 %v662, 1.442695
    %v672 = vpow.pop %v671
    %v673 = vmul.f32 %v663, 1.442695
    %v674 = vpow.pop %v673
    %v675 = vmul.f32 %v664, 1.442695
    %v676 = vpow.pop %v675
    %v677 = vmul.f32 %v665, 1.442695
    %v678 = vpow.pop %v677
    %v679 = vmul.f32 %v666, 1.442695
    %v680 = vpow.pop %v679
    %v681 = vmul.f32 %v667, 1.442695
    %v682 = vpow.pop %v681
    %v683 = vmul.f32 %v668, 1.442695
    %v684 = vpow.pop %v683
    %v685 = vadd.f32 %v670, 1.0
    %v686 = vadd.f32 %v672, 1.0
    %v687 = vadd.f32 %v674, 1.0
    %v688 = vadd.f32 %v676, 1.0
    %v689 = vadd.f32 %v678, 1.0
    %v690 = vadd.f32 %v680, 1.0
    %v691 = vadd.f32 %v682, 1.0
    %v692 = vadd.f32 %v684, 1.0
    %v693 = vrcp.pop %v685
    %v694 = vrcp.pop %v686
    %v695 = vrcp.pop %v687
    %v696 = vrcp.pop %v688
    %v697 = vrcp.pop %v689
    %v698 = vrcp.pop %v690
    %v699 = vrcp.pop %v691
    %v700 = vrcp.pop %v692
    %v701 = vmul.f32 %v524, %v693
    %v702 = vmul.f32 %v526, %v694
    %v703 = vmul.f32 %v567, %v695
    %v704 = vmul.f32 %v569, %v696
    %v705 = vmul.f32 %v528, %v697
    %v706 = vmul.f32 %v530, %v698
    %v707 = vmul.f32 %v571, %v699
    %v708 = vmul.f32 %v573, %v700
    %709 = vst [vmem:[#allocation8] sm:$0xff] %v701
    %710 = vst [vmem:[#allocation8 + $0x8] sm:$0xff] %v702
    %711 = vst [vmem:[#allocation8 + $0x10] sm:$0xff] %v703
    %712 = vst [vmem:[#allocation8 + $0x18] sm:$0xff] %v704
    %713 = vst [vmem:[#allocation8 + $0x20] sm:$0xff] %v705
    %714 = vst [vmem:[#allocation8 + $0x28] sm:$0xff] %v706
    %715 = vst [vmem:[#allocation8 + $0x30] sm:$0xff] %v707
    %716 = vst [vmem:[#allocation8 + $0x38] sm:$0xff] %v708
    // Predicated region
    $region26: #{tpu_custom_call.1} parent=1 // pred_check
      _
    $region27: #{tpu_custom_call.1} parent=1 // pred_check_branch
      %718 = sbr.rel (0) target = $region29
    $region28: #{tpu_custom_call.1} parent=1 // pred_region
      %s720 = ssub.s32 1024, 1024
      %721 = vsyncadd [#allocation4], %s720
      %s722 = sshll.u32 [#allocation8], 4
      %s723 = int_to_ptr.vmem [resolvable:$true] %s722
      %728 = dma.vmem_to_hbm [thread:$0]  %s723, 1024, %s3, [#allocation4], 512, 512, 32
    $region29: #{tpu_custom_call.1} parent=1 // pred_fallthru
      _
    // Predicated region
    $region30: #{tpu_custom_call.1} parent=1 // pred_check
      _
    $region31: #{tpu_custom_call.1} parent=1 // pred_check_branch
      %730 = sbr.rel (0) target = $region33
    $region32: #{tpu_custom_call.1} parent=1 // pred_region
      %731 = dma.done [#allocation4], 1024
    $region33: #{tpu_custom_call.1} parent=1 // pred_fallthru
      _
    %732 = vsyncpa [#allocation3], 1
    %733 = vsyncpa [#allocation6], 1
    %734 = vsyncpa [#allocation4], 1

</llo_original>
